<compile_context>
chip_gen: v7x
topology: tpu7x:2x2x1
jax: 0.10.0
libtpu: 0.0.40
codegen_flags: <defaults>
</compile_context>

<pallas_src>
import functools

import jax
import jax.numpy as jnp
from jax.experimental import pallas as pl
from jax.experimental.pallas import tpu as pltpu


def _matmul_kernel(x_ref, w_ref, o_ref):
    # x_ref : [M_pad, K_pad]      lane-dense im2col slab (zero-padded)
    # w_ref : [K_pad, C_out_pad]  taps flattened into K (zero-padded)
    # o_ref : [M_pad, C_out_pad]  lane-dense output tile
    o_ref[...] = jnp.dot(x_ref[...], w_ref[...],
                         preferred_element_type=jnp.float32).astype(o_ref.dtype)


def _round_up(v, m):
    return ((v + m - 1) // m) * m


@functools.partial(jax.jit, static_argnames=("stride", "padding", "dilation"))
def conv2d_pallas(x_nchw, w_oihw, *, stride=2, padding=3, dilation=3):
    """2-D convolution (cross-correlation), groups=1, no bias, NCHW/OIHW."""
    N, C_in, H, W = x_nchw.shape
    C_out, C_in_w, kH, kW = w_oihw.shape
    assert C_in == C_in_w, "groups=1 requires matching input channels"

    OH = (H + 2 * padding - dilation * (kH - 1) - 1) // stride + 1
    OW = (W + 2 * padding - dilation * (kW - 1) - 1) // stride + 1

    # ---- wrapper-side im2col (tiny padded tensors, pure layout plumbing) ----
    x = jnp.transpose(x_nchw, (0, 2, 3, 1))                      # NHWC
    H_need = (OH - 1) * stride + (kH - 1) * dilation + 1
    W_need = (OW - 1) * stride + (kW - 1) * dilation + 1
    pad_h_hi = max(0, H_need - H - padding)
    pad_w_hi = max(0, W_need - W - padding)
    x_pad = jnp.pad(
        x, ((0, 0), (padding, pad_h_hi), (padding, pad_w_hi), (0, 0)))

    # One strided slice per tap; columns ordered (kh, kw, c) to match w_mat.
    patches = []
    for kh in range(kH):
        for kw in range(kW):
            h0 = kh * dilation
            w0 = kw * dilation
            patches.append(
                x_pad[:, h0:h0 + (OH - 1) * stride + 1:stride,
                         w0:w0 + (OW - 1) * stride + 1:stride, :])  # [N,OH,OW,C_in]
    K = kH * kW * C_in
    M = N * OH * OW
    slab = jnp.concatenate(patches, axis=-1).reshape(M, K)        # [M, K]

    # Lane/sublane padding so every kernel tile is full and unmasked.
    K_pad = _round_up(K, 128)        # lane-dense contraction dim
    M_pad = _round_up(M, 8)          # full sublane rows
    C_out_pad = _round_up(C_out, 128)

    slab = jnp.pad(slab, ((0, M_pad - M), (0, K_pad - K)))
    w_mat = jnp.transpose(w_oihw, (2, 3, 1, 0)).reshape(K, C_out)  # [K, C_out]
    w_mat = jnp.pad(w_mat, ((0, K_pad - K), (0, C_out_pad - C_out)))

    # Single fused MXU matmul, whole operands resident in VMEM (no grid).
    out = pl.pallas_call(
        _matmul_kernel,
        out_shape=jax.ShapeDtypeStruct((M_pad, C_out_pad), x_nchw.dtype),
        in_specs=[pl.BlockSpec(memory_space=pltpu.MemorySpace.VMEM),
                  pl.BlockSpec(memory_space=pltpu.MemorySpace.VMEM)],
        out_specs=pl.BlockSpec(memory_space=pltpu.MemorySpace.VMEM),
    )(slab, w_mat)

    # Drop zero-padded rows/channels, restore NCHW.
    out = out[:M, :C_out].reshape(N, OH, OW, C_out)
    return jnp.transpose(out, (0, 3, 1, 2))


if __name__ == "__main__":
    key = jax.random.PRNGKey(0)
    kx, kw = jax.random.split(key)

    # Shapes consistent with the module: N=2, C_in=2, H=W=16; Conv2d weight
    # [C_out=10, C_in=2, kH=3, kW=3], bias=False.
    x = jax.random.normal(kx, (2, 2, 16, 16), dtype=jnp.float32)
    w = jax.random.normal(kw, (10, 2, 3, 3), dtype=jnp.float32)

    out = conv2d_pallas(x, w)
    out = jax.block_until_ready(out)

    # Reference: same semantics as the PyTorch conv (cross-correlation,
    # stride=2, padding=3, dilation=3, groups=1, no bias).
    ref = jax.lax.conv_general_dilated(
        x, w, window_strides=(2, 2), padding=((3, 3), (3, 3)),
        rhs_dilation=(3, 3),
        dimension_numbers=("NCHW", "OIHW", "NCHW"))
    assert out.shape == ref.shape, (out.shape, ref.shape)
    assert out.dtype == ref.dtype
    max_err = float(jnp.max(jnp.abs(out - ref)))
    assert jnp.allclose(out, ref, atol=1e-3, rtol=1e-3), max_err

    print("KERNEL_OK")
</pallas_src>

<mosaic_0001>
module attributes {stable_mosaic.version = 11 : i64} {
  func.func @_matmul_kernel(%arg0: memref<128x128xf32, #tpu.memory_space<vmem>>, %arg1: memref<128x128xf32, #tpu.memory_space<vmem>>, %arg2: memref<128x128xf32, #tpu.memory_space<vmem>>) attributes {dimension_semantics = [], scalar_prefetch = 0 : i64, scratch_operands = 0 : i64, tpu.core_type = #tpu.core_type<tc>} {
    %c0 = arith.constant 0 : index
    %c0_0 = arith.constant 0 : index
    %0 = vector.load %arg0[%c0, %c0_0] : memref<128x128xf32, #tpu.memory_space<vmem>>, vector<128x128xf32>
    %c0_1 = arith.constant 0 : index
    %c0_2 = arith.constant 0 : index
    %1 = vector.load %arg1[%c0_1, %c0_2] : memref<128x128xf32, #tpu.memory_space<vmem>>, vector<128x128xf32>
    %cst = arith.constant dense<0.000000e+00> : vector<128x128xf32>
    %2 = tpu.matmul %0, %1, %cst {dimension_numbers = #tpu.dot_dimension_numbers<[1], [0], [0], [1], [0, 0, 1, 1], [], []>} : vector<128x128xf32>, vector<128x128xf32>, vector<128x128xf32> -> vector<128x128xf32>
    %c0_3 = arith.constant 0 : index
    %c0_4 = arith.constant 0 : index
    %3 = vector.load %arg2[%c0_3, %c0_4] : memref<128x128xf32, #tpu.memory_space<vmem>>, vector<128x128xf32>
    tpu.vector_store %arg2[%c0_3, %c0_4], %2 {strides = array<i32>} : memref<128x128xf32, #tpu.memory_space<vmem>>, vector<128x128xf32>,
    return
  }
}

</mosaic_0001>

<llo_original>
// kernel: conv2d_pallas.1
$region0: #{conv2d_pallas.1}
  #allocation0 [shape = 'u32[]', space=smem, size = 0x4, offset = 0x4, fixed_abs, tag = 'smem constant byte address 0x4 - core index']
  #allocation1 [shape = 'u32[144,128]{1,0:T(1,128)}', space=vmem, size = 0x12000, scoped, tag = 'internal scratch']
  %s0 = inlined_call_operand.vmem [shape: f32[128,128], index: 0, kind: input, shape index: {}]
  %s1 = inlined_call_operand.vmem [shape: f32[128,128], index: 1, kind: input, shape index: {}]
  %s2 = inlined_call_operand.hbm [shape: f32[128,128], index: 2, kind: output, shape index: {}]
  %s3 = sld [smem:[#allocation0]]
  $region18: #{conv2d_pallas.1} parent=0
    _
  %s5 = ssub.s32 1, %s3
  %s6 = scalar_select 0, %s5, %s3
  $region1: #{conv2d_pallas.1} parent=0
    #allocation2 [shape = 'u8[65536]{0}', space=vmem, size = 0x10000, scoped, tag = 'output window, operand 0, single buffered']
    #allocation3 [shape = 's32[1]{0}', space=sflag, size = 0x4, scoped, tag = 'scoped memory for conv2d_pallas.1']
    %7 = vsyncpa [#allocation3], 0
    // Predicated region
    $region2: #{conv2d_pallas.1} parent=1 // pred_check
      _
    $region3: #{conv2d_pallas.1} parent=1 // pred_check_branch
      %9 = sbr.rel (0) target = $region5
    $region4: #{conv2d_pallas.1} parent=1 // pred_region
      _
    $region5: #{conv2d_pallas.1} parent=1 // pred_fallthru
      _
    // Predicated region
    $region6: #{conv2d_pallas.1} parent=1 // pred_check
      _
    $region7: #{conv2d_pallas.1} parent=1 // pred_check_branch
      %11 = sbr.rel (0) target = $region9
    $region8: #{conv2d_pallas.1} parent=1 // pred_region
      _
    $region9: #{conv2d_pallas.1} parent=1 // pred_fallthru
      _
    %v12 = vld [vmem:[%s0] sm:$0xff]
    %v13 = vld [vmem:[%s0 + $0x8] sm:$0xff]
    %v14 = vld [vmem:[%s0 + $0x10] sm:$0xff]
    %v15 = vld [vmem:[%s0 + $0x18] sm:$0xff]
    %v16 = vld [vmem:[%s0 + $0x20] sm:$0xff]
    %v17 = vld [vmem:[%s0 + $0x28] sm:$0xff]
    %v18 = vld [vmem:[%s0 + $0x30] sm:$0xff]
    %v19 = vld [vmem:[%s0 + $0x38] sm:$0xff]
    %v20 = vld [vmem:[%s0 + $0x40] sm:$0xff]
    %v21 = vld [vmem:[%s0 + $0x48] sm:$0xff]
    %v22 = vld [vmem:[%s0 + $0x50] sm:$0xff]
    %v23 = vld [vmem:[%s0 + $0x58] sm:$0xff]
    %v24 = vld [vmem:[%s0 + $0x60] sm:$0xff]
    %v25 = vld [vmem:[%s0 + $0x68] sm:$0xff]
    %v26 = vld [vmem:[%s0 + $0x70] sm:$0xff]
    %v27 = vld [vmem:[%s0 + $0x78] sm:$0xff]
    %v28 = vld [vmem:[%s1] sm:$0xff]
    %v29 = vld [vmem:[%s1 + $0x8] sm:$0xff]
    %v30 = vld [vmem:[%s1 + $0x10] sm:$0xff]
    %v31 = vld [vmem:[%s1 + $0x18] sm:$0xff]
    %v32 = vld [vmem:[%s1 + $0x20] sm:$0xff]
    %v33 = vld [vmem:[%s1 + $0x28] sm:$0xff]
    %v34 = vld [vmem:[%s1 + $0x30] sm:$0xff]
    %v35 = vld [vmem:[%s1 + $0x38] sm:$0xff]
    %v36 = vld [vmem:[%s1 + $0x40] sm:$0xff]
    %v37 = vld [vmem:[%s1 + $0x48] sm:$0xff]
    %v38 = vld [vmem:[%s1 + $0x50] sm:$0xff]
    %v39 = vld [vmem:[%s1 + $0x58] sm:$0xff]
    %v40 = vld [vmem:[%s1 + $0x60] sm:$0xff]
    %v41 = vld [vmem:[%s1 + $0x68] sm:$0xff]
    %v42 = vld [vmem:[%s1 + $0x70] sm:$0xff]
    %v43 = vld [vmem:[%s1 + $0x78] sm:$0xff]
    %44 = vmatprep.subr.mxu0 0.0
    %45 = vmatpush1.msra.mxu0 %v28
    %46 = vmatprep.subr.mxu0 0.0
    %47 = vmatpush1.msra.mxu0 %v29
    %48 = vmatprep.subr.mxu0 0.0
    %49 = vmatpush1.msra.mxu0 %v30
    %50 = vmatprep.subr.mxu0 0.0
    %51 = vmatpush1.msra.mxu0 %v31
    %52 = vmatprep.subr.mxu0 0.0
    %53 = vmatpush1.msra.mxu0 %v32
    %54 = vmatprep.subr.mxu0 0.0
    %55 = vmatpush1.msra.mxu0 %v33
    %56 = vmatprep.subr.mxu0 0.0
    %57 = vmatpush1.msra.mxu0 %v34
    %58 = vmatprep.subr.mxu0 0.0
    %59 = vmatpush1.msra.mxu0 %v35
    %60 = vmatprep.subr.mxu0 0.0
    %61 = vmatpush1.msra.mxu0 %v36
    %62 = vmatprep.subr.mxu0 0.0
    %63 = vmatpush1.msra.mxu0 %v37
    %64 = vmatprep.subr.mxu0 0.0
    %65 = vmatpush1.msra.mxu0 %v38
    %66 = vmatprep.subr.mxu0 0.0
    %67 = vmatpush1.msra.mxu0 %v39
    %68 = vmatprep.subr.mxu0 0.0
    %69 = vmatpush1.msra.mxu0 %v40
    %70 = vmatprep.subr.mxu0 0.0
    %71 = vmatpush1.msra.mxu0 %v41
    %72 = vmatprep.subr.mxu0 0.0
    %73 = vmatpush1.msra.mxu0 %v42
    %74 = vmatprep.subr.mxu0 0.0
    %75 = vmatpush1.msra.mxu0 %v43
    %76 = vmatprep.subr.mxu0 0.0
    %77 = vmatpush1.msra.mxu0 0.0
    %78 = vmatprep.subr.mxu0 0.0
    %79 = vmatpush1.msra.mxu0 0.0
    %80 = vmatprep.subr.mxu0 0.0
    %81 = vmatpush1.msra.mxu0 0.0
    %82 = vmatprep.subr.mxu0 0.0
    %83 = vmatpush1.msra.mxu0 0.0
    %84 = vmatprep.subr.mxu0 0.0
    %85 = vmatpush1.msra.mxu0 0.0
    %86 = vmatprep.subr.mxu0 0.0
    %87 = vmatpush1.msra.mxu0 0.0
    %88 = vmatprep.subr.mxu0 0.0
    %89 = vmatpush1.msra.mxu0 0.0
    %90 = vmatprep.subr.mxu0 0.0
    %91 = vmatpush1.msra.mxu0 0.0
    %92 = vmatprep.subr.mxu0 0.0
    %93 = vmatpush1.msra.mxu0 0.0
    %94 = vmatprep.subr.mxu0 0.0
    %95 = vmatpush1.msra.mxu0 0.0
    %96 = vmatprep.subr.mxu0 0.0
    %97 = vmatpush1.msra.mxu0 0.0
    %98 = vmatprep.subr.mxu0 0.0
    %99 = vmatpush1.msra.mxu0 0.0
    %100 = vmatprep.subr.mxu0 0.0
    %101 = vmatpush1.msra.mxu0 0.0
    %102 = vmatprep.subr.mxu0 0.0
    %103 = vmatpush1.msra.mxu0 0.0
    %104 = vmatprep.subr.mxu0 0.0
    %105 = vmatpush1.msra.mxu0 0.0
    %106 = vmatprep.subr.mxu0 0.0
    %107 = vmatpush1.msra.mxu0 0.0
    %108 = vmatprep.mubr.f32.mxu0 0.0
    %109 = vmatmul.mubr.f32.gmra.mrb[0].mxu0 %v12
    %v110 = vpop.f32.mrb[0].mxu0
    %v111 = vadd.f32 0.0, %v110
    %v112 = vpop.f32.mrb[0].mxu0
    %113 = vmatprep.mubr.f32.mxu0 0.0
    %114 = vmatmul.mubr.f32.gmra.mrb[0].mxu0 %v13
    %v115 = vpop.f32.mrb[0].mxu0
    %v116 = vadd.f32 0.0, %v115
    %v117 = vpop.f32.mrb[0].mxu0
    %118 = vmatprep.mubr.f32.mxu0 0.0
    %119 = vmatmul.mubr.f32.gmra.mrb[0].mxu0 %v14
    %v120 = vpop.f32.mrb[0].mxu0
    %v121 = vadd.f32 0.0, %v120
    %v122 = vpop.f32.mrb[0].mxu0
    %123 = vmatprep.mubr.f32.mxu0 0.0
    %124 = vmatmul.mubr.f32.gmra.mrb[0].mxu0 %v15
    %v125 = vpop.f32.mrb[0].mxu0
    %v126 = vadd.f32 0.0, %v125
    %v127 = vpop.f32.mrb[0].mxu0
    %128 = vmatprep.mubr.f32.mxu0 0.0
    %129 = vmatmul.mubr.f32.gmra.mrb[0].mxu0 %v16
    %v130 = vpop.f32.mrb[0].mxu0
    %v131 = vadd.f32 0.0, %v130
    %v132 = vpop.f32.mrb[0].mxu0
    %133 = vmatprep.mubr.f32.mxu0 0.0
    %134 = vmatmul.mubr.f32.gmra.mrb[0].mxu0 %v17
    %v135 = vpop.f32.mrb[0].mxu0
    %v136 = vadd.f32 0.0, %v135
    %v137 = vpop.f32.mrb[0].mxu0
    %138 = vmatprep.mubr.f32.mxu0 0.0
    %139 = vmatmul.mubr.f32.gmra.mrb[0].mxu0 %v18
    %v140 = vpop.f32.mrb[0].mxu0
    %v141 = vadd.f32 0.0, %v140
    %v142 = vpop.f32.mrb[0].mxu0
    %143 = vmatprep.mubr.f32.mxu0 0.0
    %144 = vmatmul.mubr.f32.gmra.mrb[0].mxu0 %v19
    %v145 = vpop.f32.mrb[0].mxu0
    %v146 = vadd.f32 0.0, %v145
    %v147 = vpop.f32.mrb[0].mxu0
    %148 = vmatprep.mubr.f32.mxu0 0.0
    %149 = vmatmul.mubr.f32.gmra.mrb[0].mxu0 %v20
    %v150 = vpop.f32.mrb[0].mxu0
    %v151 = vadd.f32 0.0, %v150
    %v152 = vpop.f32.mrb[0].mxu0
    %153 = vmatprep.mubr.f32.mxu0 0.0
    %154 = vmatmul.mubr.f32.gmra.mrb[0].mxu0 %v21
    %v155 = vpop.f32.mrb[0].mxu0
    %v156 = vadd.f32 0.0, %v155
    %v157 = vpop.f32.mrb[0].mxu0
    %158 = vmatprep.mubr.f32.mxu0 0.0
    %159 = vmatmul.mubr.f32.gmra.mrb[0].mxu0 %v22
    %v160 = vpop.f32.mrb[0].mxu0
    %v161 = vadd.f32 0.0, %v160
    %v162 = vpop.f32.mrb[0].mxu0
    %163 = vmatprep.mubr.f32.mxu0 0.0
    %164 = vmatmul.mubr.f32.gmra.mrb[0].mxu0 %v23
    %v165 = vpop.f32.mrb[0].mxu0
    %v166 = vadd.f32 0.0, %v165
    %v167 = vpop.f32.mrb[0].mxu0
    %168 = vmatprep.mubr.f32.mxu0 0.0
    %169 = vmatmul.mubr.f32.gmra.mrb[0].mxu0 %v24
    %v170 = vpop.f32.mrb[0].mxu0
    %v171 = vadd.f32 0.0, %v170
    %v172 = vpop.f32.mrb[0].mxu0
    %173 = vmatprep.mubr.f32.mxu0 0.0
    %174 = vmatmul.mubr.f32.gmra.mrb[0].mxu0 %v25
    %v175 = vpop.f32.mrb[0].mxu0
    %v176 = vadd.f32 0.0, %v175
    %v177 = vpop.f32.mrb[0].mxu0
    %178 = vmatprep.mubr.f32.mxu0 0.0
    %179 = vmatmul.mubr.f32.gmra.mrb[0].mxu0 %v26
    %v180 = vpop.f32.mrb[0].mxu0
    %v181 = vadd.f32 0.0, %v180
    %v182 = vpop.f32.mrb[0].mxu0
    %183 = vmatprep.mubr.f32.mxu0 0.0
    %184 = vmatmul.mubr.f32.gmra.mrb[0].mxu0 %v27
    %v185 = vpop.f32.mrb[0].mxu0
    %v186 = vadd.f32 0.0, %v185
    %v187 = vpop.f32.mrb[0].mxu0
    %188 = vdwg.mxu0
    %189 = vst [vmem:[#allocation2] sm:$0xff] %v111
    %190 = vst [vmem:[#allocation2 + $0x8] sm:$0xff] %v116
    %191 = vst [vmem:[#allocation2 + $0x10] sm:$0xff] %v121
    %192 = vst [vmem:[#allocation2 + $0x18] sm:$0xff] %v126
    %193 = vst [vmem:[#allocation2 + $0x20] sm:$0xff] %v131
    %194 = vst [vmem:[#allocation2 + $0x28] sm:$0xff] %v136
    %195 = vst [vmem:[#allocation2 + $0x30] sm:$0xff] %v141
    %196 = vst [vmem:[#allocation2 + $0x38] sm:$0xff] %v146
    %197 = vst [vmem:[#allocation2 + $0x40] sm:$0xff] %v151
    %198 = vst [vmem:[#allocation2 + $0x48] sm:$0xff] %v156
    %199 = vst [vmem:[#allocation2 + $0x50] sm:$0xff] %v161
    %200 = vst [vmem:[#allocation2 + $0x58] sm:$0xff] %v166
    %201 = vst [vmem:[#allocation2 + $0x60] sm:$0xff] %v171
    %202 = vst [vmem:[#allocation2 + $0x68] sm:$0xff] %v176
    %203 = vst [vmem:[#allocation2 + $0x70] sm:$0xff] %v181
    %204 = vst [vmem:[#allocation2 + $0x78] sm:$0xff] %v186
    // Predicated region
    $region10: #{conv2d_pallas.1} parent=1 // pred_check
      _
    $region11: #{conv2d_pallas.1} parent=1 // pred_check_branch
      %206 = sbr.rel (0) target = $region13
    $region12: #{conv2d_pallas.1} parent=1 // pred_region
      %s208 = ssub.s32 2048, 2048
      %209 = vsyncadd [#allocation3], %s208
      %s210 = sshll.u32 [#allocation2], 4
      %s211 = int_to_ptr.vmem [resolvable:$true] %s210
      %216 = dma.vmem_to_hbm [thread:$0]  %s211, 2048, %s2, [#allocation3], 128, 128, 8
    $region13: #{conv2d_pallas.1} parent=1 // pred_fallthru
      _
    // Predicated region
    $region14: #{conv2d_pallas.1} parent=1 // pred_check
      _
    $region15: #{conv2d_pallas.1} parent=1 // pred_check_branch
      %218 = sbr.rel (0) target = $region17
    $region16: #{conv2d_pallas.1} parent=1 // pred_region
      %219 = dma.done [#allocation3], 2048
    $region17: #{conv2d_pallas.1} parent=1 // pred_fallthru
      _
    %220 = vsyncpa [#allocation3], 1

</llo_original>
